<compile_context>
chip_gen: v7x
topology: tpu7x:2x2x1
jax: 0.10.0
libtpu: 0.0.40
codegen_flags: <defaults>
</compile_context>

<pallas_src>
import functools
import math

import jax
import jax.numpy as jnp
from jax import lax
from jax.experimental import pallas as pl
from jax.experimental.pallas import tpu as pltpu


# ---------------------------------------------------------------------------
# Config (small, synthetic, consistent with the module)
# ---------------------------------------------------------------------------
HIDDEN = 32          # hidden_size
N_HEADS = 4          # num_attention_heads
HEAD_DIM = 8         # head_dim
N_KV_HEADS = 2       # num_key_value_heads
KV_GROUPS = N_HEADS // N_KV_HEADS
ROPE_THETA = 10000.0

BATCH = 2
SEQ = 8

NEG_BIAS = -1e30     # large finite: exp underflows to 0, no inf-inf NaN risk


# ---------------------------------------------------------------------------
# Fused attention kernel: one grid step == one batch element
# ---------------------------------------------------------------------------
def fused_attention_kernel(x_ref, wqkv_ref, wo_ref,
                           cos_q_ref, sin_q_ref, cos_k_ref, sin_k_ref,
                           bias_ref, o_ref, *,
                           seq, n_heads, n_kv_heads, head_dim):
    g = n_heads // n_kv_heads
    d2 = head_dim // 2
    qw = n_heads * head_dim
    kw = n_kv_heads * head_dim

    x = x_ref[0]                                                        # (S, H)

    # --- fused q/k/v projection: single MXU pass, f32 accumulation.
    #     (1/sqrt(D) query scale is pre-folded into the Wq columns.)
    qkv = jnp.dot(x, wqkv_ref[...], preferred_element_type=jnp.float32)  # (S, (nH+2kvH)*D)

    # --- per-kv-group gather (GQA): the g query heads that share kv head j
    #     are stacked on the row axis; K/V are NOT duplicated.
    def head(base, h):
        return qkv[:, base + h * head_dim: base + (h + 1) * head_dim]    # (S, D)

    qg = jnp.stack(
        [jnp.concatenate([head(0, j * g + r) for r in range(g)], axis=0)
         for j in range(n_kv_heads)], axis=0)                            # (kvH, g*S, D)
    k3 = jnp.stack([head(qw, j) for j in range(n_kv_heads)], axis=0)     # (kvH, S, D)
    v3 = jnp.stack([head(qw + kw, j) for j in range(n_kv_heads)], axis=0)

    # --- RoPE: one half-swap per tensor (rotate_half sign baked into sin);
    #     (g*S, D)/(S, D) tables broadcast over the kv-head axis.
    def half_swap(t):
        return jnp.concatenate([t[..., d2:], t[..., :d2]], axis=-1)

    qg = qg * cos_q_ref[...][None] + half_swap(qg) * sin_q_ref[...][None]
    k3 = k3 * cos_k_ref[...][None] + half_swap(k3) * sin_k_ref[...][None]

    # --- scores (scale already folded in) + precomputed additive causal bias
    scores = lax.dot_general(qg, k3, (((2,), (2,)), ((0,), (0,))),
                             preferred_element_type=jnp.float32)         # (kvH, gS, S)
    scores = scores + bias_ref[...][None]

    # --- softmax (f32) and PV; normalisation via EUP reciprocal
    m = jnp.max(scores, axis=-1, keepdims=True)
    p = jnp.exp(scores - m)
    denom = jnp.sum(p, axis=-1, keepdims=True)
    ctx = lax.dot_general(p, v3, (((2,), (1,)), ((0,), (0,))),
                          preferred_element_type=jnp.float32)            # (kvH, gS, D)
    ctx = ctx * pl.reciprocal(denom, approx=True)

    # --- back to the lane-packed (S, nH*D) layout, then o_proj
    parts = [ctx[h // g, (h % g) * seq:(h % g + 1) * seq, :]
             for h in range(n_heads)]
    ctx2d = jnp.concatenate(parts, axis=-1)                              # (S, nH*D)

    out = jnp.dot(ctx2d, wo_ref[...], preferred_element_type=jnp.float32)  # (S, H)
    # hidden=32 < 128 lanes -> masked store; lane-dense at real hidden sizes.
    o_ref[0] = out.astype(o_ref.dtype)


# ---------------------------------------------------------------------------
# Wrapper: one pallas_call, grid over batch ("parallel" -> both TCs on v7x)
# ---------------------------------------------------------------------------
@jax.jit
def mistral_attention(x, wqkv, wo, cos_q, sin_q, cos_k, sin_k, bias):
    b, s, h = x.shape
    kernel = functools.partial(
        fused_attention_kernel, seq=s,
        n_heads=N_HEADS, n_kv_heads=N_KV_HEADS, head_dim=HEAD_DIM)

    vmem = pltpu.MemorySpace.VMEM
    grid_spec = pltpu.PrefetchScalarGridSpec(
        num_scalar_prefetch=0,
        grid=(b,),
        in_specs=[
            pl.BlockSpec((1, s, h), lambda i: (i, 0, 0), memory_space=vmem),
            pl.BlockSpec(wqkv.shape, lambda i: (0, 0), memory_space=vmem),
            pl.BlockSpec(wo.shape, lambda i: (0, 0), memory_space=vmem),
            pl.BlockSpec(cos_q.shape, lambda i: (0, 0), memory_space=vmem),
            pl.BlockSpec(sin_q.shape, lambda i: (0, 0), memory_space=vmem),
            pl.BlockSpec(cos_k.shape, lambda i: (0, 0), memory_space=vmem),
            pl.BlockSpec(sin_k.shape, lambda i: (0, 0), memory_space=vmem),
            pl.BlockSpec(bias.shape, lambda i: (0, 0), memory_space=vmem),
        ],
        out_specs=pl.BlockSpec((1, s, h), lambda i: (i, 0, 0), memory_space=vmem),
    )
    return pl.pallas_call(
        kernel,
        out_shape=jax.ShapeDtypeStruct((b, s, h), x.dtype),
        grid_spec=grid_spec,
        compiler_params=pltpu.CompilerParams(
            dimension_semantics=("parallel",)),
    )(x, wqkv, wo, cos_q, sin_q, cos_k, sin_k, bias)


# ---------------------------------------------------------------------------
# Host-side precomputation (once, outside the jitted forward)
# ---------------------------------------------------------------------------
def rope_tables(seq, head_dim, groups, theta=ROPE_THETA, dtype=jnp.float32):
    pos = jnp.arange(seq, dtype=jnp.float32)
    inv_freq = 1.0 / (theta ** (jnp.arange(0, head_dim, 2, dtype=jnp.float32) / head_dim))
    freqs = pos[:, None] * inv_freq[None, :]                   # (S, D/2)
    emb = jnp.concatenate([freqs, freqs], axis=-1)             # (S, D)
    cos = jnp.cos(emb)
    sin = jnp.sin(emb)
    d2 = head_dim // 2
    sin_signed = jnp.concatenate([-sin[:, :d2], sin[:, d2:]], axis=-1)
    # q rows are (group-major, seq-minor): row r -> position r % S
    cos_q = jnp.tile(cos, (groups, 1)).astype(dtype)           # (g*S, D)
    sin_q = jnp.tile(sin_signed, (groups, 1)).astype(dtype)
    return cos_q, sin_q, cos.astype(dtype), sin_signed.astype(dtype)


def causal_bias(seq, groups, dtype=jnp.float32):
    r = jnp.arange(groups * seq) % seq                         # query position per row
    c = jnp.arange(seq)
    return jnp.where(c[None, :] <= r[:, None], 0.0, NEG_BIAS).astype(dtype)


# ---------------------------------------------------------------------------
# Pure-JAX reference (mirrors the PyTorch module) for a correctness check
# ---------------------------------------------------------------------------
def attention_reference(x, params, theta=ROPE_THETA):
    b, s, _ = x.shape
    q = (x @ params["wq"]).reshape(b, s, N_HEADS, HEAD_DIM)
    k = (x @ params["wk"]).reshape(b, s, N_KV_HEADS, HEAD_DIM)
    v = (x @ params["wv"]).reshape(b, s, N_KV_HEADS, HEAD_DIM)
    k = jnp.repeat(k, KV_GROUPS, axis=2)
    v = jnp.repeat(v, KV_GROUPS, axis=2)
    q, k, v = (t.transpose(0, 2, 1, 3) for t in (q, k, v))      # (B, nH, S, D)

    pos = jnp.arange(s, dtype=jnp.float32)
    inv_freq = 1.0 / (theta ** (jnp.arange(0, HEAD_DIM, 2, dtype=jnp.float32) / HEAD_DIM))
    emb = jnp.concatenate([pos[:, None] * inv_freq[None, :]] * 2, axis=-1)
    cos, sin = jnp.cos(emb)[None, None], jnp.sin(emb)[None, None]

    def rot(t):
        d2 = HEAD_DIM // 2
        return jnp.concatenate([-t[..., d2:], t[..., :d2]], axis=-1)

    q = q * cos + rot(q) * sin
    k = k * cos + rot(k) * sin

    scores = jnp.einsum("bhqd,bhkd->bhqk", q, k) / math.sqrt(HEAD_DIM)
    mask = jnp.tril(jnp.ones((s, s), bool))
    scores = jnp.where(mask, scores, -jnp.inf)
    p = jax.nn.softmax(scores, axis=-1)
    ctx = jnp.einsum("bhqk,bhkd->bhqd", p, v)
    ctx = ctx.transpose(0, 2, 1, 3).reshape(b, s, N_HEADS * HEAD_DIM)
    return ctx @ params["wo"]


def init_params(key):
    keys = jax.random.split(key, 4)
    scale = 0.05
    return {
        "wq": jax.random.normal(keys[0], (HIDDEN, N_HEADS * HEAD_DIM), jnp.float32) * scale,
        "wk": jax.random.normal(keys[1], (HIDDEN, N_KV_HEADS * HEAD_DIM), jnp.float32) * scale,
        "wv": jax.random.normal(keys[2], (HIDDEN, N_KV_HEADS * HEAD_DIM), jnp.float32) * scale,
        "wo": jax.random.normal(keys[3], (N_HEADS * HEAD_DIM, HIDDEN), jnp.float32) * scale,
    }


if __name__ == "__main__":
    key = jax.random.PRNGKey(0)
    pkey, xkey = jax.random.split(key)
    params = init_params(pkey)
    x = jax.random.normal(xkey, (BATCH, SEQ, HIDDEN), jnp.float32)

    # Fused QKV weight with the 1/sqrt(head_dim) scale folded into Wq columns.
    wqkv = jnp.concatenate([params["wq"] * (1.0 / math.sqrt(HEAD_DIM)),
                            params["wk"], params["wv"]], axis=1)
    cos_q, sin_q, cos_k, sin_k = rope_tables(SEQ, HEAD_DIM, KV_GROUPS)
    bias = causal_bias(SEQ, KV_GROUPS)

    out = mistral_attention(x, wqkv, params["wo"], cos_q, sin_q, cos_k, sin_k, bias)
    out = jax.block_until_ready(out)

    assert out.shape == (BATCH, SEQ, HIDDEN)
    assert bool(jnp.all(jnp.isfinite(out)))

    ref = attention_reference(x, params)
    err = float(jnp.max(jnp.abs(out - ref)))
    assert err < 5e-3, f"max abs err vs reference: {err}"

    print("KERNEL_OK")
</pallas_src>

<mosaic_0001>
module attributes {stable_mosaic.version = 11 : i64} {
  func.func @fused_attention_kernel(%arg0: i32, %arg1: memref<1x8x32xf32, #tpu.memory_space<vmem>>, %arg2: memref<32x64xf32, #tpu.memory_space<vmem>>, %arg3: memref<32x32xf32, #tpu.memory_space<vmem>>, %arg4: memref<16x8xf32, #tpu.memory_space<vmem>>, %arg5: memref<16x8xf32, #tpu.memory_space<vmem>>, %arg6: memref<8x8xf32, #tpu.memory_space<vmem>>, %arg7: memref<8x8xf32, #tpu.memory_space<vmem>>, %arg8: memref<16x8xf32, #tpu.memory_space<vmem>>, %arg9: memref<1x8x32xf32, #tpu.memory_space<vmem>>) attributes {dimension_semantics = [#tpu.dimension_semantics<parallel>], iteration_bounds = array<i64: 2>, scalar_prefetch = 0 : i64, scratch_operands = 0 : i64, tpu.core_type = #tpu.core_type<tc>, window_params = [{transform_indices = @transform_0, window_bounds = array<i64: 1, 8, 32>}, {pipeline_mode = #tpu.pipeline_mode<synchronous>, transform_indices = @transform_1, window_bounds = array<i64: 32, 64>}, {pipeline_mode = #tpu.pipeline_mode<synchronous>, transform_indices = @transform_2, window_bounds = array<i64: 32, 32>}, {pipeline_mode = #tpu.pipeline_mode<synchronous>, transform_indices = @transform_3, window_bounds = array<i64: 16, 8>}, {pipeline_mode = #tpu.pipeline_mode<synchronous>, transform_indices = @transform_4, window_bounds = array<i64: 16, 8>}, {pipeline_mode = #tpu.pipeline_mode<synchronous>, transform_indices = @transform_5, window_bounds = array<i64: 8, 8>}, {pipeline_mode = #tpu.pipeline_mode<synchronous>, transform_indices = @transform_6, window_bounds = array<i64: 8, 8>}, {pipeline_mode = #tpu.pipeline_mode<synchronous>, transform_indices = @transform_7, window_bounds = array<i64: 16, 8>}, {transform_indices = @transform_8, window_bounds = array<i64: 1, 8, 32>}]} {
    %c0 = arith.constant 0 : index
    %c0_0 = arith.constant 0 : index
    %c0_1 = arith.constant 0 : index
    %0 = vector.load %arg1[%c0, %c0_0, %c0_1] : memref<1x8x32xf32, #tpu.memory_space<vmem>>, vector<1x8x32xf32>
    %1 = vector.shape_cast %0 : vector<1x8x32xf32> to vector<8x32xf32>
    %c0_2 = arith.constant 0 : index
    %c0_3 = arith.constant 0 : index
    %2 = vector.load %arg2[%c0_2, %c0_3] : memref<32x64xf32, #tpu.memory_space<vmem>>, vector<32x64xf32>
    %cst = arith.constant dense<0.000000e+00> : vector<8x64xf32>
    %3 = tpu.matmul %1, %2, %cst {dimension_numbers = #tpu.dot_dimension_numbers<[1], [0], [0], [1], [0, 0, 1, 1], [], []>} : vector<8x32xf32>, vector<32x64xf32>, vector<8x64xf32> -> vector<8x64xf32>
    %4 = vector.extract_strided_slice %3 {offsets = [0, 0], sizes = [8, 8], strides = [1, 1]} : vector<8x64xf32> to vector<8x8xf32>
    %5 = vector.extract_strided_slice %3 {offsets = [0, 8], sizes = [8, 8], strides = [1, 1]} : vector<8x64xf32> to vector<8x8xf32>
    %6 = tpu.concatenate %4, %5 in 0 : vector<8x8xf32>, vector<8x8xf32> -> vector<16x8xf32>
    %7 = vector.extract_strided_slice %3 {offsets = [0, 16], sizes = [8, 8], strides = [1, 1]} : vector<8x64xf32> to vector<8x8xf32>
    %8 = vector.extract_strided_slice %3 {offsets = [0, 24], sizes = [8, 8], strides = [1, 1]} : vector<8x64xf32> to vector<8x8xf32>
    %9 = tpu.concatenate %7, %8 in 0 : vector<8x8xf32>, vector<8x8xf32> -> vector<16x8xf32>
    %10 = vector.shape_cast %6 : vector<16x8xf32> to vector<1x16x8xf32>
    %11 = vector.shape_cast %9 : vector<16x8xf32> to vector<1x16x8xf32>
    %12 = tpu.concatenate %10, %11 in 0 : vector<1x16x8xf32>, vector<1x16x8xf32> -> vector<2x16x8xf32>
    %13 = vector.extract_strided_slice %3 {offsets = [0, 32], sizes = [8, 8], strides = [1, 1]} : vector<8x64xf32> to vector<8x8xf32>
    %14 = vector.extract_strided_slice %3 {offsets = [0, 40], sizes = [8, 8], strides = [1, 1]} : vector<8x64xf32> to vector<8x8xf32>
    %15 = vector.shape_cast %13 : vector<8x8xf32> to vector<1x8x8xf32>
    %16 = vector.shape_cast %14 : vector<8x8xf32> to vector<1x8x8xf32>
    %17 = tpu.concatenate %15, %16 in 0 : vector<1x8x8xf32>, vector<1x8x8xf32> -> vector<2x8x8xf32>
    %18 = vector.extract_strided_slice %3 {offsets = [0, 48], sizes = [8, 8], strides = [1, 1]} : vector<8x64xf32> to vector<8x8xf32>
    %19 = vector.extract_strided_slice %3 {offsets = [0, 56], sizes = [8, 8], strides = [1, 1]} : vector<8x64xf32> to vector<8x8xf32>
    %20 = vector.shape_cast %18 : vector<8x8xf32> to vector<1x8x8xf32>
    %21 = vector.shape_cast %19 : vector<8x8xf32> to vector<1x8x8xf32>
    %22 = tpu.concatenate %20, %21 in 0 : vector<1x8x8xf32>, vector<1x8x8xf32> -> vector<2x8x8xf32>
    %c0_4 = arith.constant 0 : index
    %c0_5 = arith.constant 0 : index
    %23 = vector.load %arg4[%c0_4, %c0_5] : memref<16x8xf32, #tpu.memory_space<vmem>>, vector<16x8xf32>
    %24 = vector.shape_cast %23 : vector<16x8xf32> to vector<1x16x8xf32>
    %25 = vector.broadcast %24 : vector<1x16x8xf32> to vector<2x16x8xf32>
    %26 = arith.mulf %12, %25 : vector<2x16x8xf32>
    %27 = vector.extract_strided_slice %12 {offsets = [0, 0, 4], sizes = [2, 16, 4], strides = [1, 1, 1]} : vector<2x16x8xf32> to vector<2x16x4xf32>
    %28 = vector.extract_strided_slice %12 {offsets = [0, 0, 0], sizes = [2, 16, 4], strides = [1, 1, 1]} : vector<2x16x8xf32> to vector<2x16x4xf32>
    %29 = tpu.concatenate %27, %28 in 2 : vector<2x16x4xf32>, vector<2x16x4xf32> -> vector<2x16x8xf32>
    %c0_6 = arith.constant 0 : index
    %c0_7 = arith.constant 0 : index
    %30 = vector.load %arg5[%c0_6, %c0_7] : memref<16x8xf32, #tpu.memory_space<vmem>>, vector<16x8xf32>
    %31 = vector.shape_cast %30 : vector<16x8xf32> to vector<1x16x8xf32>
    %32 = vector.broadcast %31 : vector<1x16x8xf32> to vector<2x16x8xf32>
    %33 = arith.mulf %29, %32 : vector<2x16x8xf32>
    %34 = arith.addf %26, %33 : vector<2x16x8xf32>
    %c0_8 = arith.constant 0 : index
    %c0_9 = arith.constant 0 : index
    %35 = vector.load %arg6[%c0_8, %c0_9] : memref<8x8xf32, #tpu.memory_space<vmem>>, vector<8x8xf32>
    %36 = vector.shape_cast %35 : vector<8x8xf32> to vector<1x8x8xf32>
    %37 = vector.broadcast %36 : vector<1x8x8xf32> to vector<2x8x8xf32>
    %38 = arith.mulf %17, %37 : vector<2x8x8xf32>
    %39 = vector.extract_strided_slice %17 {offsets = [0, 0, 4], sizes = [2, 8, 4], strides = [1, 1, 1]} : vector<2x8x8xf32> to vector<2x8x4xf32>
    %40 = vector.extract_strided_slice %17 {offsets = [0, 0, 0], sizes = [2, 8, 4], strides = [1, 1, 1]} : vector<2x8x8xf32> to vector<2x8x4xf32>
    %41 = tpu.concatenate %39, %40 in 2 : vector<2x8x4xf32>, vector<2x8x4xf32> -> vector<2x8x8xf32>
    %c0_10 = arith.constant 0 : index
    %c0_11 = arith.constant 0 : index
    %42 = vector.load %arg7[%c0_10, %c0_11] : memref<8x8xf32, #tpu.memory_space<vmem>>, vector<8x8xf32>
    %43 = vector.shape_cast %42 : vector<8x8xf32> to vector<1x8x8xf32>
    %44 = vector.broadcast %43 : vector<1x8x8xf32> to vector<2x8x8xf32>
    %45 = arith.mulf %41, %44 : vector<2x8x8xf32>
    %46 = arith.addf %38, %45 : vector<2x8x8xf32>
    %cst_12 = arith.constant dense<0.000000e+00> : vector<2x16x8xf32>
    %47 = tpu.matmul %34, %46, %cst_12 {dimension_numbers = #tpu.dot_dimension_numbers<[2], [2], [1], [1], [0, 0, 0, 1, 1, 1], [0], [0]>} : vector<2x16x8xf32>, vector<2x8x8xf32>, vector<2x16x8xf32> -> vector<2x16x8xf32>
    %c0_13 = arith.constant 0 : index
    %c0_14 = arith.constant 0 : index
    %48 = vector.load %arg8[%c0_13, %c0_14] : memref<16x8xf32, #tpu.memory_space<vmem>>, vector<16x8xf32>
    %49 = vector.shape_cast %48 : vector<16x8xf32> to vector<1x16x8xf32>
    %50 = vector.broadcast %49 : vector<1x16x8xf32> to vector<2x16x8xf32>
    %51 = arith.addf %47, %50 : vector<2x16x8xf32>
    %cst_15 = arith.constant dense<0xFF800000> : vector<2x16xf32>
    %52 = vector.multi_reduction <maximumf>, %51, %cst_15 [2] : vector<2x16x8xf32> to vector<2x16xf32>
    %53 = vector.shape_cast %52 : vector<2x16xf32> to vector<2x16x1xf32>
    %54 = vector.broadcast %53 : vector<2x16x1xf32> to vector<2x16x8xf32>
    %55 = arith.subf %51, %54 : vector<2x16x8xf32>
    %56 = math.exp %55 : vector<2x16x8xf32>
    %cst_16 = arith.constant dense<0.000000e+00> : vector<2x16xf32>
    %57 = vector.multi_reduction <add>, %56, %cst_16 [2] : vector<2x16x8xf32> to vector<2x16xf32>
    %58 = vector.shape_cast %57 : vector<2x16xf32> to vector<2x16x1xf32>
    %cst_17 = arith.constant dense<0.000000e+00> : vector<2x16x8xf32>
    %59 = tpu.matmul %56, %22, %cst_17 {dimension_numbers = #tpu.dot_dimension_numbers<[2], [1], [1], [2], [0, 0, 0, 1, 1, 2], [0], [0]>} : vector<2x16x8xf32>, vector<2x8x8xf32>, vector<2x16x8xf32> -> vector<2x16x8xf32>
    %60 = tpu.reciprocal %58 {approx = true} : vector<2x16x1xf32> -> vector<2x16x1xf32>
    %61 = vector.broadcast %60 : vector<2x16x1xf32> to vector<2x16x8xf32>
    %62 = arith.mulf %59, %61 : vector<2x16x8xf32>
    %63 = vector.extract_strided_slice %62 {offsets = [0, 0, 0], sizes = [1, 8, 8], strides = [1, 1, 1]} : vector<2x16x8xf32> to vector<1x8x8xf32>
    %64 = vector.shape_cast %63 : vector<1x8x8xf32> to vector<8x8xf32>
    %65 = vector.extract_strided_slice %62 {offsets = [0, 8, 0], sizes = [1, 8, 8], strides = [1, 1, 1]} : vector<2x16x8xf32> to vector<1x8x8xf32>
    %66 = vector.shape_cast %65 : vector<1x8x8xf32> to vector<8x8xf32>
    %67 = vector.extract_strided_slice %62 {offsets = [1, 0, 0], sizes = [1, 8, 8], strides = [1, 1, 1]} : vector<2x16x8xf32> to vector<1x8x8xf32>
    %68 = vector.shape_cast %67 : vector<1x8x8xf32> to vector<8x8xf32>
    %69 = vector.extract_strided_slice %62 {offsets = [1, 8, 0], sizes = [1, 8, 8], strides = [1, 1, 1]} : vector<2x16x8xf32> to vector<1x8x8xf32>
    %70 = vector.shape_cast %69 : vector<1x8x8xf32> to vector<8x8xf32>
    %71 = tpu.concatenate %64, %66, %68, %70 in 1 : vector<8x8xf32>, vector<8x8xf32>, vector<8x8xf32>, vector<8x8xf32> -> vector<8x32xf32>
    %c0_18 = arith.constant 0 : index
    %c0_19 = arith.constant 0 : index
    %72 = vector.load %arg3[%c0_18, %c0_19] : memref<32x32xf32, #tpu.memory_space<vmem>>, vector<32x32xf32>
    %cst_20 = arith.constant dense<0.000000e+00> : vector<8x32xf32>
    %73 = tpu.matmul %71, %72, %cst_20 {dimension_numbers = #tpu.dot_dimension_numbers<[1], [0], [0], [1], [0, 0, 1, 1], [], []>} : vector<8x32xf32>, vector<32x32xf32>, vector<8x32xf32> -> vector<8x32xf32>
    %c0_21 = arith.constant 0 : index
    %c0_22 = arith.constant 0 : index
    %c0_23 = arith.constant 0 : index
    %74 = vector.load %arg9[%c0_21, %c0_22, %c0_23] : memref<1x8x32xf32, #tpu.memory_space<vmem>>, vector<1x8x32xf32>
    %75 = vector.shape_cast %74 : vector<1x8x32xf32> to vector<8x32xf32>
    %76 = vector.shape_cast %73 : vector<8x32xf32> to vector<1x8x32xf32>
    tpu.vector_store %arg9[%c0_21, %c0_22, %c0_23], %76 {strides = array<i32>} : memref<1x8x32xf32, #tpu.memory_space<vmem>>, vector<1x8x32xf32>,
    return
  }
  func.func @transform_0(%arg0: i32) -> (i32, i32, i32) {
    %c0_i32 = arith.constant 0 : i32
    %c0_i32_0 = arith.constant 0 : i32
    %c0_i32_1 = arith.constant 0 : i32
    return %arg0, %c0_i32, %c0_i32_0 : i32, i32, i32
  }
  func.func @transform_1(%arg0: i32) -> (i32, i32) {
    %c0_i32 = arith.constant 0 : i32
    %c0_i32_0 = arith.constant 0 : i32
    %c0_i32_1 = arith.constant 0 : i32
    return %c0_i32, %c0_i32_0 : i32, i32
  }
  func.func @transform_2(%arg0: i32) -> (i32, i32) {
    %c0_i32 = arith.constant 0 : i32
    %c0_i32_0 = arith.constant 0 : i32
    %c0_i32_1 = arith.constant 0 : i32
    return %c0_i32, %c0_i32_0 : i32, i32
  }
  func.func @transform_3(%arg0: i32) -> (i32, i32) {
    %c0_i32 = arith.constant 0 : i32
    %c0_i32_0 = arith.constant 0 : i32
    %c0_i32_1 = arith.constant 0 : i32
    return %c0_i32, %c0_i32_0 : i32, i32
  }
  func.func @transform_4(%arg0: i32) -> (i32, i32) {
    %c0_i32 = arith.constant 0 : i32
    %c0_i32_0 = arith.constant 0 : i32
    %c0_i32_1 = arith.constant 0 : i32
    return %c0_i32, %c0_i32_0 : i32, i32
  }
  func.func @transform_5(%arg0: i32) -> (i32, i32) {
    %c0_i32 = arith.constant 0 : i32
    %c0_i32_0 = arith.constant 0 : i32
    %c0_i32_1 = arith.constant 0 : i32
    return %c0_i32, %c0_i32_0 : i32, i32
  }
  func.func @transform_6(%arg0: i32) -> (i32, i32) {
    %c0_i32 = arith.constant 0 : i32
    %c0_i32_0 = arith.constant 0 : i32
    %c0_i32_1 = arith.constant 0 : i32
    return %c0_i32, %c0_i32_0 : i32, i32
  }
  func.func @transform_7(%arg0: i32) -> (i32, i32) {
    %c0_i32 = arith.constant 0 : i32
    %c0_i32_0 = arith.constant 0 : i32
    %c0_i32_1 = arith.constant 0 : i32
    return %c0_i32, %c0_i32_0 : i32, i32
  }
  func.func @transform_8(%arg0: i32) -> (i32, i32, i32) {
    %c0_i32 = arith.constant 0 : i32
    %c0_i32_0 = arith.constant 0 : i32
    %c0_i32_1 = arith.constant 0 : i32
    return %arg0, %c0_i32, %c0_i32_0 : i32, i32, i32
  }
}

</mosaic_0001>

<llo_original>
// kernel: mistral_attention.1
$region0: #{mistral_attention.1}
  #allocation0 [shape = 'u32[]', space=smem, size = 0x4, offset = 0x4, fixed_abs, tag = 'smem constant byte address 0x4 - core index']
  #allocation1 [shape = 'u32[144,128]{1,0:T(1,128)}', space=vmem, size = 0x12000, scoped, tag = 'internal scratch']
  %s0 = inlined_call_operand.hbm [shape: f32[2,8,32], index: 0, kind: input, shape index: {}]
  %s1 = inlined_call_operand.vmem [shape: f32[32,64], index: 1, kind: input, shape index: {}]
  %s2 = inlined_call_operand.vmem [shape: f32[32,32], index: 2, kind: input, shape index: {}]
  %s3 = inlined_call_operand.vmem [shape: f32[16,8], index: 3, kind: input, shape index: {}]
  %s4 = inlined_call_operand.vmem [shape: f32[16,8], index: 4, kind: input, shape index: {}]
  %s5 = inlined_call_operand.hbm [shape: f32[8,8], index: 5, kind: input, shape index: {}]
  %s6 = inlined_call_operand.hbm [shape: f32[8,8], index: 6, kind: input, shape index: {}]
  %s7 = inlined_call_operand.vmem [shape: f32[16,8], index: 7, kind: input, shape index: {}]
  %s8 = inlined_call_operand.hbm [shape: f32[2,8,32], index: 8, kind: output, shape index: {}]
  %s9 = sld [smem:[#allocation0]]
  $region77: #{mistral_attention.1} parent=0
    _
  %s11 = ssub.s32 1, %s9
  %s12 = scalar_select 0, %s11, %s9
  $region1: #{mistral_attention.1} parent=0
    #allocation2 [shape = 'u8[8192]{0}', space=vmem, size = 0x2000, scoped, tag = 'input window, operand 0']
    #allocation3 [shape = 's32[2]{0}', space=sflag, size = 0x8, scoped, tag = 'scoped memory for mistral_attention.1']
    #allocation4 [shape = 's32[2]{0}', space=sflag, size = 0x8, scoped, tag = 'scoped memory for mistral_attention.1']
    #allocation5 [shape = 'u8[4096]{0}', space=vmem, size = 0x1000, scoped, tag = 'input window, operand 5, single buffered']
    #allocation6 [shape = 's32[1]{0}', space=sflag, size = 0x4, scoped, tag = 'scoped memory for mistral_attention.1']
    #allocation7 [shape = 'u8[4096]{0}', space=vmem, size = 0x1000, scoped, tag = 'input window, operand 6, single buffered']
    #allocation8 [shape = 'u8[8192]{0}', space=vmem, size = 0x2000, scoped, tag = 'output window, operand 0']
    %13 = vsyncpa [#allocation3], 0
    %s14 = scalar_lea.sflag [#allocation3], 1
    %15 = vsyncpa %s14, 0
    %16 = vsyncpa [#allocation6], 0
    %17 = vsyncpa [#allocation4], 0
    %s18 = scalar_lea.sflag [#allocation4], 1
    %19 = vsyncpa %s18, 0
    loop: start=0, step=1, limit=4
    $region2: #{mistral_attention.1} parent=1 // loop_pre_header
      _
    $region3: #{mistral_attention.1} parent=1 // loop_header
      %s21 = sphi 0, %s25
      %p22 = scmp.ge.s32.totalorder %s21, 4
      %s31 = sphi 0, %s33
      %s34 = sphi 0, %s31
      %s35 = sphi 0, %s34
      %s51 = sphi 0, %s35
      %s55 = sphi 0, %s55
      %s57 = sphi 0, %s55
      %s58 = sphi 0, %s57
      %s72 = sphi 0, %s58
      %s76 = sphi 0, %s76
      %s78 = sphi 0, %s76
      %s79 = sphi 0, %s78
      %s93 = sphi 0, %s79
      %s97 = sphi 0, %s97
      %s99 = sphi 0, %s97
      %s100 = sphi 0, %s99
      %s114 = sphi 0, %s100
      %s118 = sphi 0, %s118
      %s120 = sphi 0, %s118
      %s121 = sphi 0, %s120
      %s135 = sphi 0, %s121
      %s139 = sphi 0, %s139
      %s141 = sphi 0, %s139
      %s142 = sphi 0, %s141
      %s156 = sphi 0, %s142
      %s160 = sphi 0, %s160
      %s162 = sphi 0, %s160
      %s163 = sphi 0, %s162
      %s177 = sphi 0, %s163
      %s181 = sphi 0, %s181
      %s183 = sphi 0, %s181
      %s184 = sphi 0, %s183
      %s198 = sphi 0, %s184
      %s204 = sphi 0, %s206
      %s207 = sphi 0, %s204
      %s208 = sphi 0, %s207
      %s224 = sphi 0, %s208
    $region4: #{mistral_attention.1} parent=1 // loop_header_branch
      %24 = sbr.rel (%p22) target = $region8
    $region5: #{mistral_attention.1} parent=1 // loop_body
      %s26 = ssub.s32 %s21, 1
      %s27 = ssub.s32 %s21, 2
      %s28 = sadd.s32 %s21, 1
      %s29 = ssub.s32 %s21, %s28
      %p30 = scmp.eq.s32.totalorder %s29, 0
      %s32 = sadd.s32 %s31, 1
      %s33 = scalar_select %p30, %s31, %s32
      %p36 = pneg %p30
      %p37 = scmp.eq.s32.totalorder %s21, 1
      %p38 = por %p36, %p37
      %p39 = scmp.ne.s32.totalorder %s31, %s34
      %p40 = scmp.eq.s32.totalorder %s21, 0
      %p41 = por %p39, %p40
      %p42 = scmp.ne.s32.totalorder %s31, %s34
      %p43 = scmp.eq.s32.totalorder %s26, 1
      %p44 = por %p42, %p43
      %p45 = scmp.ne.s32.totalorder %s34, %s35
      %p46 = scmp.eq.s32.totalorder %s26, 0
      %p47 = por %p45, %p46
      %p48 = scmp.ne.s32.totalorder %s34, %s35
      %p49 = scmp.eq.s32.totalorder %s27, 1
      %p50 = por %p48, %p49
      %p52 = scmp.ne.s32.totalorder %s35, %s51
      %p53 = scmp.eq.s32.totalorder %s27, 0
      %p54 = por %p52, %p53
      %s56 = sadd.s32 %s55, 1
      %p59 = scmp.eq.s32.totalorder %s21, 1
      %p60 = scmp.ne.s32.totalorder %s55, %s57
      %p61 = scmp.eq.s32.totalorder %s21, 0
      %p62 = por %p60, %p61
      %p63 = scmp.ne.s32.totalorder %s55, %s57
      %p64 = scmp.eq.s32.totalorder %s26, 1
      %p65 = por %p63, %p64
      %p66 = scmp.ne.s32.totalorder %s57, %s58
      %p67 = scmp.eq.s32.totalorder %s26, 0
      %p68 = por %p66, %p67
      %p69 = scmp.ne.s32.totalorder %s57, %s58
      %p70 = scmp.eq.s32.totalorder %s27, 1
      %p71 = por %p69, %p70
      %p73 = scmp.ne.s32.totalorder %s58, %s72
      %p74 = scmp.eq.s32.totalorder %s27, 0
      %p75 = por %p73, %p74
      %s77 = sadd.s32 %s76, 1
      %p80 = scmp.eq.s32.totalorder %s21, 1
      %p81 = scmp.ne.s32.totalorder %s76, %s78
      %p82 = scmp.eq.s32.totalorder %s21, 0
      %p83 = por %p81, %p82
      %p84 = scmp.ne.s32.totalorder %s76, %s78
      %p85 = scmp.eq.s32.totalorder %s26, 1
      %p86 = por %p84, %p85
      %p87 = scmp.ne.s32.totalorder %s78, %s79
      %p88 = scmp.eq.s32.totalorder %s26, 0
      %p89 = por %p87, %p88
      %p90 = scmp.ne.s32.totalorder %s78, %s79
      %p91 = scmp.eq.s32.totalorder %s27, 1
      %p92 = por %p90, %p91
      %p94 = scmp.ne.s32.totalorder %s79, %s93
      %p95 = scmp.eq.s32.totalorder %s27, 0
      %p96 = por %p94, %p95
      %s98 = sadd.s32 %s97, 1
      %p101 = scmp.eq.s32.totalorder %s21, 1
      %p102 = scmp.ne.s32.totalorder %s97, %s99
      %p103 = scmp.eq.s32.totalorder %s21, 0
      %p104 = por %p102, %p103
      %p105 = scmp.ne.s32.totalorder %s97, %s99
      %p106 = scmp.eq.s32.totalorder %s26, 1
      %p107 = por %p105, %p106
      %p108 = scmp.ne.s32.totalorder %s99, %s100
      %p109 = scmp.eq.s32.totalorder %s26, 0
      %p110 = por %p108, %p109
      %p111 = scmp.ne.s32.totalorder %s99, %s100
      %p112 = scmp.eq.s32.totalorder %s27, 1
      %p113 = por %p111, %p112
      %p115 = scmp.ne.s32.totalorder %s100, %s114
      %p116 = scmp.eq.s32.totalorder %s27, 0
      %p117 = por %p115, %p116
      %s119 = sadd.s32 %s118, 1
      %p122 = scmp.eq.s32.totalorder %s21, 1
      %p123 = scmp.ne.s32.totalorder %s118, %s120
      %p124 = scmp.eq.s32.totalorder %s21, 0
      %p125 = por %p123, %p124
      %p126 = scmp.ne.s32.totalorder %s118, %s120
      %p127 = scmp.eq.s32.totalorder %s26, 1
      %p128 = por %p126, %p127
      %p129 = scmp.ne.s32.totalorder %s120, %s121
      %p130 = scmp.eq.s32.totalorder %s26, 0
      %p131 = por %p129, %p130
      %p132 = scmp.ne.s32.totalorder %s120, %s121
      %p133 = scmp.eq.s32.totalorder %s27, 1
      %p134 = por %p132, %p133
      %p136 = scmp.ne.s32.totalorder %s121, %s135
      %p137 = scmp.eq.s32.totalorder %s27, 0
      %p138 = por %p136, %p137
      %s140 = sadd.s32 %s139, 1
      %p143 = scmp.eq.s32.totalorder %s21, 1
      %p144 = scmp.ne.s32.totalorder %s139, %s141
      %p145 = scmp.eq.s32.totalorder %s21, 0
      %p146 = por %p144, %p145
      %p147 = scmp.ne.s32.totalorder %s139, %s141
      %p148 = scmp.eq.s32.totalorder %s26, 1
      %p149 = por %p147, %p148
      %p150 = scmp.ne.s32.totalorder %s141, %s142
      %p151 = scmp.eq.s32.totalorder %s26, 0
      %p152 = por %p150, %p151
      %p153 = scmp.ne.s32.totalorder %s141, %s142
      %p154 = scmp.eq.s32.totalorder %s27, 1
      %p155 = por %p153, %p154
      %p157 = scmp.ne.s32.totalorder %s142, %s156
      %p158 = scmp.eq.s32.totalorder %s27, 0
      %p159 = por %p157, %p158
      %s161 = sadd.s32 %s160, 1
      %p164 = scmp.eq.s32.totalorder %s21, 1
      %p165 = scmp.ne.s32.totalorder %s160, %s162
      %p166 = scmp.eq.s32.totalorder %s21, 0
      %p167 = por %p165, %p166
      %p168 = scmp.ne.s32.totalorder %s160, %s162
      %p169 = scmp.eq.s32.totalorder %s26, 1
      %p170 = por %p168, %p169
      %p171 = scmp.ne.s32.totalorder %s162, %s163
      %p172 = scmp.eq.s32.totalorder %s26, 0
      %p173 = por %p171, %p172
      %p174 = scmp.ne.s32.totalorder %s162, %s163
      %p175 = scmp.eq.s32.totalorder %s27, 1
      %p176 = por %p174, %p175
      %p178 = scmp.ne.s32.totalorder %s163, %s177
      %p179 = scmp.eq.s32.totalorder %s27, 0
      %p180 = por %p178, %p179
      %s182 = sadd.s32 %s181, 1
      %p185 = scmp.eq.s32.totalorder %s21, 1
      %p186 = scmp.ne.s32.totalorder %s181, %s183
      %p187 = scmp.eq.s32.totalorder %s21, 0
      %p188 = por %p186, %p187
      %p189 = scmp.ne.s32.totalorder %s181, %s183
      %p190 = scmp.eq.s32.totalorder %s26, 1
      %p191 = por %p189, %p190
      %p192 = scmp.ne.s32.totalorder %s183, %s184
      %p193 = scmp.eq.s32.totalorder %s26, 0
      %p194 = por %p192, %p193
      %p195 = scmp.ne.s32.totalorder %s183, %s184
      %p196 = scmp.eq.s32.totalorder %s27, 1
      %p197 = por %p195, %p196
      %p199 = scmp.ne.s32.totalorder %s184, %s198
      %p200 = scmp.eq.s32.totalorder %s27, 0
      %p201 = por %p199, %p200
      %s202 = ssub.s32 %s21, %s28
      %p203 = scmp.eq.s32.totalorder %s202, 0
      %s205 = sadd.s32 %s204, 1
      %s206 = scalar_select %p203, %s204, %s205
      %p209 = pneg %p203
      %p210 = scmp.eq.s32.totalorder %s21, 1
      %p211 = por %p209, %p210
      %p212 = scmp.ne.s32.totalorder %s204, %s207
      %p213 = scmp.eq.s32.totalorder %s21, 0
      %p214 = por %p212, %p213
      %p215 = scmp.ne.s32.totalorder %s204, %s207
      %p216 = scmp.eq.s32.totalorder %s26, 1
      %p217 = por %p215, %p216
      %p218 = scmp.ne.s32.totalorder %s207, %s208
      %p219 = scmp.eq.s32.totalorder %s26, 0
      %p220 = por %p218, %p219
      %p221 = scmp.ne.s32.totalorder %s207, %s208
      %p222 = scmp.eq.s32.totalorder %s27, 1
      %p223 = por %p221, %p222
      %p225 = scmp.ne.s32.totalorder %s208, %s224
      %p226 = scmp.eq.s32.totalorder %s27, 0
      %p227 = por %p225, %p226
      %p228 = scmp.le.s32.totalorder 1, %s21
      %p229 = scmp.lt.s32.totalorder %s21, 3
      %p230 = pnand %p228, %p229
      %p231 = pneg %p230
      // Predicated region
      $region9: #{mistral_attention.1} parent=5 // pred_check
        _
      $region10: #{mistral_attention.1} parent=5 // pred_check_branch
        %233 = sbr.rel (%p230) target = $region12
      $region11: #{mistral_attention.1} parent=5 // pred_region
        %s234 = ssub.s32 %s21, 1
        // Predicated region
        $region13: #{mistral_attention.1} parent=11 // pred_check
          %p235 = pneg %p68
        $region14: #{mistral_attention.1} parent=11 // pred_check_branch
          %237 = sbr.rel (%p235) target = $region16
        $region15: #{mistral_attention.1} parent=11 // pred_region
          _
        $region16: #{mistral_attention.1} parent=11 // pred_fallthru
          _
        // Predicated region
        $region17: #{mistral_attention.1} parent=11 // pred_check
          %p238 = pneg %p89
        $region18: #{mistral_attention.1} parent=11 // pred_check_branch
          %240 = sbr.rel (%p238) target = $region20
        $region19: #{mistral_attention.1} parent=11 // pred_region
          _
        $region20: #{mistral_attention.1} parent=11 // pred_fallthru
          _
        // Predicated region
        $region21: #{mistral_attention.1} parent=11 // pred_check
          %p241 = pneg %p110
        $region22: #{mistral_attention.1} parent=11 // pred_check_branch
          %243 = sbr.rel (%p241) target = $region24
        $region23: #{mistral_attention.1} parent=11 // pred_region
          _
        $region24: #{mistral_attention.1} parent=11 // pred_fallthru
          _
        // Predicated region
        $region25: #{mistral_attention.1} parent=11 // pred_check
          %p244 = pneg %p131
        $region26: #{mistral_attention.1} parent=11 // pred_check_branch
          %246 = sbr.rel (%p244) target = $region28
        $region27: #{mistral_attention.1} parent=11 // pred_region
          _
        $region28: #{mistral_attention.1} parent=11 // pred_fallthru
          _
        // Predicated region
        $region29: #{mistral_attention.1} parent=11 // pred_check
          %p247 = pneg %p152
        $region30: #{mistral_attention.1} parent=11 // pred_check_branch
          %249 = sbr.rel (%p247) target = $region32
        $region31: #{mistral_attention.1} parent=11 // pred_region
          %s251 = ssub.s32 128, 128
          %252 = vsyncadd [#allocation6], %s251
          %s254 = sshll.u32 [#allocation5], 4
          %s255 = int_to_ptr.vmem [resolvable:$true] %s254
          %257 = dma.hbm_to_vmem [thread:$0]  %s5, 128, %s255, [#allocation6]
        $region32: #{mistral_attention.1} parent=11 // pred_fallthru
          _
        // Predicated region
        $region33: #{mistral_attention.1} parent=11 // pred_check
          %p258 = pneg %p173
        $region34: #{mistral_attention.1} parent=11 // pred_check_branch
          %260 = sbr.rel (%p258) target = $region36
        $region35: #{mistral_attention.1} parent=11 // pred_region
          %s262 = ssub.s32 128, 128
          %263 = vsyncadd [#allocation6], %s262
          %s265 = sshll.u32 [#allocation7], 4
          %s266 = int_to_ptr.vmem [resolvable:$true] %s265
          %268 = dma.hbm_to_vmem [thread:$0]  %s6, 128, %s266, [#allocation6]
        $region36: #{mistral_attention.1} parent=11 // pred_fallthru
          _
        // Predicated region
        $region37: #{mistral_attention.1} parent=11 // pred_check
          %p269 = pneg %p194
        $region38: #{mistral_attention.1} parent=11 // pred_check_branch
          %271 = sbr.rel (%p269) target = $region40
        $region39: #{mistral_attention.1} parent=11 // pred_region
          _
        $region40: #{mistral_attention.1} parent=11 // pred_fallthru
          _
      $region12: #{mistral_attention.1} parent=5 // pred_fallthru
        _
      %p272 = scmp.lt.s32.totalorder %s21, 2
      // Predicated region
      $region41: #{mistral_attention.1} parent=5 // pred_check
        %p273 = pneg %p272
      $region42: #{mistral_attention.1} parent=5 // pred_check_branch
        %275 = sbr.rel (%p273) target = $region44
      $region43: #{mistral_attention.1} parent=5 // pred_region
        // Predicated region
        $region45: #{mistral_attention.1} parent=43 // pred_check
          %p276 = pneg %p41
        $region46: #{mistral_attention.1} parent=43 // pred_check_branch
          %278 = sbr.rel (%p276) target = $region48
        $region47: #{mistral_attention.1} parent=43 // pred_region
          %s279 = sand.u32 %s31, 1
          %s280 = scalar_lea.sflag [#allocation3], %s279
          %s281 = sand.u32 %s31, 1
          %s282 = smul.addr %s281, 8
          %s283 = scalar_lea.vmem [#allocation2], %s282
          %s285 = ssub.s32 128, 128
          %286 = vsyncadd %s280, %s285
          %s287 = smul.addr %s21, 128
          %s288 = scalar_lea.hbm %s0, %s287
          %s290 = sshll.u32 %s283, 4
          %s291 = int_to_ptr.vmem [resolvable:$true] %s290
          %293 = dma.hbm_to_vmem [thread:$0]  %s288, 128, %s291, %s280
        $region48: #{mistral_attention.1} parent=43 // pred_fallthru
          _
      $region44: #{mistral_attention.1} parent=5 // pred_fallthru
        _
      %p294 = scmp.le.s32.totalorder 1, %s21
      %p295 = scmp.lt.s32.totalorder %s21, 3
      %p296 = pnand %p294, %p295
      %p297 = pneg %p296
      // Predicated region
      $region49: #{mistral_attention.1} parent=5 // pred_check
        _
      $region50: #{mistral_attention.1} parent=5 // pred_check_branch
        %299 = sbr.rel (%p296) target = $region52
      $region51: #{mistral_attention.1} parent=5 // pred_region
        %s300 = ssub.s32 %s21, 1
        %s301 = sand.u32 %s34, 1
        %s302 = scalar_lea.sflag [#allocation3], %s301
        %s303 = sand.u32 %s34, 1
        %s304 = smul.addr %s303, 8
        %s305 = scalar_lea.vmem [#allocation2], %s304
        // Predicated region
        $region53: #{mistral_attention.1} parent=51 // pred_check
          %p306 = pneg %p47
        $region54: #{mistral_attention.1} parent=51 // pred_check_branch
          %308 = sbr.rel (%p306) target = $region56
        $region55: #{mistral_attention.1} parent=51 // pred_region
          %309 = dma.done %s302, 128
        $region56: #{mistral_attention.1} parent=51 // pred_fallthru
          _
        // Predicated region
        $region57: #{mistral_attention.1} parent=51 // pred_check
          %p310 = pneg %p152
        $region58: #{mistral_attention.1} parent=51 // pred_check_branch
          %312 = sbr.rel (%p310) target = $region60
        $region59: #{mistral_attention.1} parent=51 // pred_region
          %313 = dma.done [#allocation6], 128
        $region60: #{mistral_attention.1} parent=51 // pred_fallthru
          _
        // Predicated region
        $region61: #{mistral_attention.1} parent=51 // pred_check
          %p314 = pneg %p173
        $region62: #{mistral_attention.1} parent=51 // pred_check_branch
          %316 = sbr.rel (%p314) target = $region64
        $region63: #{mistral_attention.1} parent=51 // pred_region
          %317 = dma.done [#allocation6], 128
        $region64: #{mistral_attention.1} parent=51 // pred_fallthru
          _
        %s318 = sand.u32 %s34, 1
        %s319 = scalar_lea.sflag [#allocation3], %s318
        %s320 = sand.u32 %s34, 1
        %s321 = smul.addr %s320, 8
        %s322 = scalar_lea.vmem [#allocation2], %s321
        %p323 = pneg %p47
        %p324 = pneg %p44
        %p325 = pneg %p68
        %p326 = pneg %p65
        %p327 = pneg %p89
        %p328 = pneg %p86
        %p329 = pneg %p110
        %p330 = pneg %p107
        %p331 = pneg %p131
        %p332 = pneg %p128
        %p333 = pneg %p152
        %p334 = pneg %p149
        %p335 = pneg %p173
        %p336 = pneg %p170
        %p337 = pneg %p194
        %p338 = pneg %p191
        %p339 = pneg %p220
        %p340 = pneg %p217
        %s341 = sand.u32 %s207, 1
        %s342 = scalar_lea.sflag [#allocation4], %s341
        %s343 = sand.u32 %s207, 1
        %s344 = smul.addr %s343, 8
        %s345 = scalar_lea.vmem [#allocation8], %s344
        %v346 = vld [vmem:[%s305] sm:$0xff]
        %v347 = vld [vmem:[%s1] sm:$0xff]
        %v348 = vld [vmem:[%s1 + $0x8] sm:$0xff]
        %v349 = vld [vmem:[%s1 + $0x10] sm:$0xff]
        %v350 = vld [vmem:[%s1 + $0x18] sm:$0xff]
        %vm351 = vcmask 261120
        %v353 = vsel %vm351, %v346, 0
        %355 = vmatprep.subr.mxu0 0.0
        %356 = vmatpush1.msra.mxu0 %v347
        %357 = vmatprep.subr.mxu0 0.0
        %358 = vmatpush1.msra.mxu0 %v348
        %359 = vmatprep.subr.mxu0 0.0
        %360 = vmatpush1.msra.mxu0 %v349
        %361 = vmatprep.subr.mxu0 0.0
        %362 = vmatpush1.msra.mxu0 %v350
        %363 = vmatprep.subr.mxu0 0.0
        %364 = vmatpush1.msra.mxu0 0.0
        %365 = vmatprep.subr.mxu0 0.0
        %366 = vmatpush1.msra.mxu0 0.0
        %367 = vmatprep.subr.mxu0 0.0
        %368 = vmatpush1.msra.mxu0 0.0
        %369 = vmatprep.subr.mxu0 0.0
        %370 = vmatpush1.msra.mxu0 0.0
        %371 = vmatprep.subr.mxu0 0.0
        %372 = vmatpush1.msra.mxu0 0.0
        %373 = vmatprep.subr.mxu0 0.0
        %374 = vmatpush1.msra.mxu0 0.0
        %375 = vmatprep.subr.mxu0 0.0
        %376 = vmatpush1.msra.mxu0 0.0
        %377 = vmatprep.subr.mxu0 0.0
        %378 = vmatpush1.msra.mxu0 0.0
        %379 = vmatprep.subr.mxu0 0.0
        %380 = vmatpush1.msra.mxu0 0.0
        %381 = vmatprep.subr.mxu0 0.0
        %382 = vmatpush1.msra.mxu0 0.0
        %383 = vmatprep.subr.mxu0 0.0
        %384 = vmatpush1.msra.mxu0 0.0
        %385 = vmatprep.subr.mxu0 0.0
        %386 = vmatpush1.msra.mxu0 0.0
        %387 = vmatprep.subr.mxu0 0.0
        %388 = vmatpush1.msra.mxu0 0.0
        %389 = vmatprep.subr.mxu0 0.0
        %390 = vmatpush1.msra.mxu0 0.0
        %391 = vmatprep.subr.mxu0 0.0
        %392 = vmatpush1.msra.mxu0 0.0
        %393 = vmatprep.subr.mxu0 0.0
        %394 = vmatpush1.msra.mxu0 0.0
        %395 = vmatprep.subr.mxu0 0.0
        %396 = vmatpush1.msra.mxu0 0.0
        %397 = vmatprep.subr.mxu0 0.0
        %398 = vmatpush1.msra.mxu0 0.0
        %399 = vmatprep.subr.mxu0 0.0
        %400 = vmatpush1.msra.mxu0 0.0
        %401 = vmatprep.subr.mxu0 0.0
        %402 = vmatpush1.msra.mxu0 0.0
        %403 = vmatprep.subr.mxu0 0.0
        %404 = vmatpush1.msra.mxu0 0.0
        %405 = vmatprep.subr.mxu0 0.0
        %406 = vmatpush1.msra.mxu0 0.0
        %407 = vmatprep.subr.mxu0 0.0
        %408 = vmatpush1.msra.mxu0 0.0
        %409 = vmatprep.subr.mxu0 0.0
        %410 = vmatpush1.msra.mxu0 0.0
        %411 = vmatprep.subr.mxu0 0.0
        %412 = vmatpush1.msra.mxu0 0.0
        %413 = vmatprep.subr.mxu0 0.0
        %414 = vmatpush1.msra.mxu0 0.0
        %415 = vmatprep.subr.mxu0 0.0
        %416 = vmatpush1.msra.mxu0 0.0
        %417 = vmatprep.subr.mxu0 0.0
        %418 = vmatpush1.msra.mxu0 0.0
        %419 = vmatprep.mubr.f32.mxu0 0.0
        %420 = vmatmul.mubr.f32.gmra.mrb[0].mxu0 %v353
        %v421 = vpop.f32.mrb[0].mxu0
        %v422 = vadd.f32 0.0, %v421
        %v423 = vpop.f32.mrb[0].mxu0
        %424 = vdwg.mxu0
        %426 = vrot.lane.b32.xlu0 %v422, 120
        %v427 = vpop.permute.xlu0 %426
        %429 = vrot.lane.b32.xlu0 %v422, 112
        %v430 = vpop.permute.xlu0 %429
        %431 = vrot.lane.b32.xlu0 %v427, 112
        %v432 = vpop.permute.xlu0 %431
        %v435 = vld [vmem:[%s3] sm:$0xff]
        %v436 = vld [vmem:[%s3 + $0x8] sm:$0xff]
        %v437 = vmul.f32 %v422, %v435
        %v438 = vmul.f32 %v427, %v436
        %v439 = vmul.f32 %v430, %v435
        %v440 = vmul.f32 %v432, %v436
        %441 = vrot.lane.b32.xlu0 %v422, 124
        %v442 = vpop.permute.xlu0 %441
        %443 = vrot.lane.b32.xlu0 %v427, 124
        %v444 = vpop.permute.xlu0 %443
        %445 = vrot.lane.b32.xlu0 %v430, 124
        %v446 = vpop.permute.xlu0 %445
        %447 = vrot.lane.b32.xlu0 %v432, 124
        %v448 = vpop.permute.xlu0 %447
        %453 = vrot.lane.b32.xlu0 %v422, 4
        %v454 = vpop.permute.xlu0 %453
        %455 = vrot.lane.b32.xlu0 %v427, 4
        %v456 = vpop.permute.xlu0 %455
        %457 = vrot.lane.b32.xlu0 %v430, 4
        %v458 = vpop.permute.xlu0 %457
        %459 = vrot.lane.b32.xlu0 %v432, 4
        %v460 = vpop.permute.xlu0 %459
        %vm465 = vcmask 31744
        %v466 = vsel %vm465, %v442, %v454
        %v467 = vsel %vm465, %v444, %v456
        %v468 = vsel %vm465, %v446, %v458
        %v469 = vsel %vm465, %v448, %v460
        %v470 = vld [vmem:[%s4] sm:$0xff]
        %v471 = vld [vmem:[%s4 + $0x8] sm:$0xff]
        %v472 = vmul.f32 %v466, %v470
        %v473 = vmul.f32 %v467, %v471
        %v474 = vmul.f32 %v468, %v470
        %v475 = vmul.f32 %v469, %v471
        %v476 = vadd.f32 %v437, %v472
        %v477 = vadd.f32 %v438, %v473
        %v478 = vadd.f32 %v439, %v474
        %v479 = vadd.f32 %v440, %v475
        %v480 = vld [vmem:[#allocation5] sm:$0xff]
        %482 = vrot.lane.b32.xlu0 %v480, 32
        %v483 = vpop.permute.xlu0 %482
        %v485 = vmul.f32 %v422, %v483
        %v486 = vmul.f32 %v427, %v483
        %487 = vrot.lane.b32.xlu0 %v422, 92
        %v488 = vpop.permute.xlu0 %487
        %489 = vrot.lane.b32.xlu0 %v427, 92
        %v490 = vpop.permute.xlu0 %489
        %493 = vrot.lane.b32.xlu0 %v422, 100
        %v494 = vpop.permute.xlu0 %493
        %495 = vrot.lane.b32.xlu0 %v427, 100
        %v496 = vpop.permute.xlu0 %495
        %v499 = vsel %vm465, %v488, %v494
        %v500 = vsel %vm465, %v490, %v496
        %v501 = vld [vmem:[#allocation7] sm:$0xff]
        %v502 = vmul.f32 %v499, %v501
        %v503 = vmul.f32 %v500, %v501
        %506 = vrot.lane.b32.xlu0 %v502, 32
        %v507 = vpop.permute.xlu0 %506
        %508 = vrot.lane.b32.xlu0 %v503, 32
        %v509 = vpop.permute.xlu0 %508
        %v512 = vadd.f32 %v485, %v507
        %v513 = vadd.f32 %v486, %v509
        %v514 = vld [vmem:[%s7] sm:$0xff]
        %v515 = vld [vmem:[%s7 + $0x8] sm:$0xff]
        %517 = vrot.lane.b32.xlu0 %v512, 96
        %v518 = vpop.permute.xlu0 %517
        %vm519 = vcmask 64512
        %v521 = vsel %vm519, %v476, 0
        %v524 = vsel %vm519, %v477, 0
        %v526 = vsel %vm519, %v518, 0
        %528 = vmatprep.subr.mxu0 0.0
        %529 = vmatpush1.xpose.msra.mxu0 %v526
        %530 = vmatprep.subr.mxu0 0.0
        %531 = vmatpush1.xpose.msra.mxu0 0.0
        %532 = vmatprep.subr.mxu0 0.0
        %533 = vmatpush1.xpose.msra.mxu0 0.0
        %534 = vmatprep.subr.mxu0 0.0
        %535 = vmatpush1.xpose.msra.mxu0 0.0
        %536 = vmatprep.subr.mxu0 0.0
        %537 = vmatpush1.xpose.msra.mxu0 0.0
        %538 = vmatprep.subr.mxu0 0.0
        %539 = vmatpush1.xpose.msra.mxu0 0.0
        %540 = vmatprep.subr.mxu0 0.0
        %541 = vmatpush1.xpose.msra.mxu0 0.0
        %542 = vmatprep.subr.mxu0 0.0
        %543 = vmatpush1.xpose.msra.mxu0 0.0
        %544 = vmatprep.subr.mxu0 0.0
        %545 = vmatpush1.xpose.msra.mxu0 0.0
        %546 = vmatprep.subr.mxu0 0.0
        %547 = vmatpush1.xpose.msra.mxu0 0.0
        %548 = vmatprep.subr.mxu0 0.0
        %549 = vmatpush1.xpose.msra.mxu0 0.0
        %550 = vmatprep.subr.mxu0 0.0
        %551 = vmatpush1.xpose.msra.mxu0 0.0
        %552 = vmatprep.subr.mxu0 0.0
        %553 = vmatpush1.xpose.msra.mxu0 0.0
        %554 = vmatprep.subr.mxu0 0.0
        %555 = vmatpush1.xpose.msra.mxu0 0.0
        %556 = vmatprep.subr.mxu0 0.0
        %557 = vmatpush1.xpose.msra.mxu0 0.0
        %558 = vmatprep.subr.mxu0 0.0
        %559 = vmatpush1.xpose.msra.mxu0 0.0
        %560 = vmatprep.subr.mxu0 0.0
        %561 = vmatpush1.xpose.msra.mxu0 0.0
        %562 = vmatprep.subr.mxu0 0.0
        %563 = vmatpush1.xpose.msra.mxu0 0.0
        %564 = vmatprep.subr.mxu0 0.0
        %565 = vmatpush1.xpose.msra.mxu0 0.0
        %566 = vmatprep.subr.mxu0 0.0
        %567 = vmatpush1.xpose.msra.mxu0 0.0
        %568 = vmatprep.subr.mxu0 0.0
        %569 = vmatpush1.xpose.msra.mxu0 0.0
        %570 = vmatprep.subr.mxu0 0.0
        %571 = vmatpush1.xpose.msra.mxu0 0.0
        %572 = vmatprep.subr.mxu0 0.0
        %573 = vmatpush1.xpose.msra.mxu0 0.0
        %574 = vmatprep.subr.mxu0 0.0
        %575 = vmatpush1.xpose.msra.mxu0 0.0
        %576 = vmatprep.subr.mxu0 0.0
        %577 = vmatpush1.xpose.msra.mxu0 0.0
        %578 = vmatprep.subr.mxu0 0.0
        %579 = vmatpush1.xpose.msra.mxu0 0.0
        %580 = vmatprep.subr.mxu0 0.0
        %581 = vmatpush1.xpose.msra.mxu0 0.0
        %582 = vmatprep.subr.mxu0 0.0
        %583 = vmatpush1.xpose.msra.mxu0 0.0
        %584 = vmatprep.subr.mxu0 0.0
        %585 = vmatpush1.xpose.msra.mxu0 0.0
        %586 = vmatprep.subr.mxu0 0.0
        %587 = vmatpush1.xpose.msra.mxu0 0.0
        %588 = vmatprep.subr.mxu0 0.0
        %589 = vmatpush1.xpose.msra.mxu0 0.0
        %590 = vmatprep.subr.mxu0 0.0
        %591 = vmatpush1.xpose.msra.mxu0 0.0
        %592 = vmatprep.mubr.f32.mxu0 0.0
        %593 = vmatmul.mubr.f32.gmra.mrb[0].mxu0 %v521
        %v594 = vpop.f32.mrb[0].mxu0
        %v595 = vadd.f32 %v514, %v594
        %v596 = vpop.f32.mrb[0].mxu0
        %597 = vmatprep.mubr.f32.mxu0 0.0
        %598 = vmatmul.mubr.f32.gmra.mrb[0].mxu0 %v524
        %v599 = vpop.f32.mrb[0].mxu0
        %v600 = vadd.f32 %v515, %v599
        %v601 = vpop.f32.mrb[0].mxu0
        %602 = vdwg.mxu0
        %604 = vrot.lane.b32.xlu0 %v513, 96
        %v605 = vpop.permute.xlu0 %604
        %v607 = vsel %vm519, %v478, 0
        %v610 = vsel %vm519, %v479, 0
        %v612 = vsel %vm519, %v605, 0
        %614 = vmatprep.subr.mxu0 0.0
        %615 = vmatpush1.xpose.msra.mxu0 %v612
        %616 = vmatprep.subr.mxu0 0.0
        %617 = vmatpush1.xpose.msra.mxu0 0.0
        %618 = vmatprep.subr.mxu0 0.0
        %619 = vmatpush1.xpose.msra.mxu0 0.0
        %620 = vmatprep.subr.mxu0 0.0
        %621 = vmatpush1.xpose.msra.mxu0 0.0
        %622 = vmatprep.subr.mxu0 0.0
        %623 = vmatpush1.xpose.msra.mxu0 0.0
        %624 = vmatprep.subr.mxu0 0.0
        %625 = vmatpush1.xpose.msra.mxu0 0.0
        %626 = vmatprep.subr.mxu0 0.0
        %627 = vmatpush1.xpose.msra.mxu0 0.0
        %628 = vmatprep.subr.mxu0 0.0
        %629 = vmatpush1.xpose.msra.mxu0 0.0
        %630 = vmatprep.subr.mxu0 0.0
        %631 = vmatpush1.xpose.msra.mxu0 0.0
        %632 = vmatprep.subr.mxu0 0.0
        %633 = vmatpush1.xpose.msra.mxu0 0.0
        %634 = vmatprep.subr.mxu0 0.0
        %635 = vmatpush1.xpose.msra.mxu0 0.0
        %636 = vmatprep.subr.mxu0 0.0
        %637 = vmatpush1.xpose.msra.mxu0 0.0
        %638 = vmatprep.subr.mxu0 0.0
        %639 = vmatpush1.xpose.msra.mxu0 0.0
        %640 = vmatprep.subr.mxu0 0.0
        %641 = vmatpush1.xpose.msra.mxu0 0.0
        %642 = vmatprep.subr.mxu0 0.0
        %643 = vmatpush1.xpose.msra.mxu0 0.0
        %644 = vmatprep.subr.mxu0 0.0
        %645 = vmatpush1.xpose.msra.mxu0 0.0
        %646 = vmatprep.subr.mxu0 0.0
        %647 = vmatpush1.xpose.msra.mxu0 0.0
        %648 = vmatprep.subr.mxu0 0.0
        %649 = vmatpush1.xpose.msra.mxu0 0.0
        %650 = vmatprep.subr.mxu0 0.0
        %651 = vmatpush1.xpose.msra.mxu0 0.0
        %652 = vmatprep.subr.mxu0 0.0
        %653 = vmatpush1.xpose.msra.mxu0 0.0
        %654 = vmatprep.subr.mxu0 0.0
        %655 = vmatpush1.xpose.msra.mxu0 0.0
        %656 = vmatprep.subr.mxu0 0.0
        %657 = vmatpush1.xpose.msra.mxu0 0.0
        %658 = vmatprep.subr.mxu0 0.0
        %659 = vmatpush1.xpose.msra.mxu0 0.0
        %660 = vmatprep.subr.mxu0 0.0
        %661 = vmatpush1.xpose.msra.mxu0 0.0
        %662 = vmatprep.subr.mxu0 0.0
        %663 = vmatpush1.xpose.msra.mxu0 0.0
        %664 = vmatprep.subr.mxu0 0.0
        %665 = vmatpush1.xpose.msra.mxu0 0.0
        %666 = vmatprep.subr.mxu0 0.0
        %667 = vmatpush1.xpose.msra.mxu0 0.0
        %668 = vmatprep.subr.mxu0 0.0
        %669 = vmatpush1.xpose.msra.mxu0 0.0
        %670 = vmatprep.subr.mxu0 0.0
        %671 = vmatpush1.xpose.msra.mxu0 0.0
        %672 = vmatprep.subr.mxu0 0.0
        %673 = vmatpush1.xpose.msra.mxu0 0.0
        %674 = vmatprep.subr.mxu0 0.0
        %675 = vmatpush1.xpose.msra.mxu0 0.0
        %676 = vmatprep.subr.mxu0 0.0
        %677 = vmatpush1.xpose.msra.mxu0 0.0
        %678 = vmatprep.mubr.f32.mxu0 0.0
        %679 = vmatmul.mubr.f32.gmra.mrb[0].mxu0 %v607
        %v680 = vpop.f32.mrb[0].mxu0
        %v681 = vadd.f32 %v514, %v680
        %v682 = vpop.f32.mrb[0].mxu0
        %683 = vmatprep.mubr.f32.mxu0 0.0
        %684 = vmatmul.mubr.f32.gmra.mrb[0].mxu0 %v610
        %v685 = vpop.f32.mrb[0].mxu0
        %v686 = vadd.f32 %v515, %v685
        %v687 = vpop.f32.mrb[0].mxu0
        %688 = vdwg.mxu0
        %v689 = vsel %vm519, %v595, -inf
        %690 = vmax.xlane.f32.xlu0 %v689
        %v691 = vpop.xlane.xlu0 %690
        %v692 = vsel %vm519, %v600, -inf
        %693 = vmax.xlane.f32.xlu0 %v692
        %v694 = vpop.xlane.xlu0 %693
        %v695 = vsel %vm519, %v681, -inf
        %696 = vmax.xlane.f32.xlu0 %v695
        %v697 = vpop.xlane.xlu0 %696
        %v698 = vsel %vm519, %v686, -inf
        %699 = vmax.xlane.f32.xlu0 %v698
        %v700 = vpop.xlane.xlu0 %699
        %v701 = vsub.f32 %v595, %v691
        %v702 = vsub.f32 %v600, %v694
        %v703 = vsub.f32 %v681, %v697
        %v704 = vsub.f32 %v686, %v700
        %v705 = vmul.f32 %v701, 1.442695
        %v706 = vpow.pop %v705
        %v707 = vmul.f32 %v702, 1.442695
        %v708 = vpow.pop %v707
        %v709 = vmul.f32 %v703, 1.442695
        %v710 = vpow.pop %v709
        %v711 = vmul.f32 %v704, 1.442695
        %v712 = vpow.pop %v711
        %v713 = vsel %vm519, %v706, 0.0
        %714 = vadd.xlane.f32.xlu0 %v713
        %v715 = vpop.xlane.xlu0 %714
        %v716 = vsel %vm519, %v708, 0.0
        %717 = vadd.xlane.f32.xlu0 %v716
        %v718 = vpop.xlane.xlu0 %717
        %v719 = vsel %vm519, %v710, 0.0
        %720 = vadd.xlane.f32.xlu0 %v719
        %v721 = vpop.xlane.xlu0 %720
        %v722 = vsel %vm519, %v712, 0.0
        %723 = vadd.xlane.f32.xlu0 %v722
        %v724 = vpop.xlane.xlu0 %723
        %725 = vrot.lane.b32.xlu0 %v422, 80
        %v726 = vpop.permute.xlu0 %725
        %v729 = vsel %vm519, %v706, 0
        %v732 = vsel %vm519, %v708, 0
        %734 = vmatprep.subr.mxu0 0.0
        %735 = vmatpush1.msra.mxu0 %v726
        %736 = vmatprep.subr.mxu0 0.0
        %737 = vmatpush1.msra.mxu0 0.0
        %738 = vmatprep.subr.mxu0 0.0
        %739 = vmatpush1.msra.mxu0 0.0
        %740 = vmatprep.subr.mxu0 0.0
        %741 = vmatpush1.msra.mxu0 0.0
        %742 = vmatprep.subr.mxu0 0.0
        %743 = vmatpush1.msra.mxu0 0.0
        %744 = vmatprep.subr.mxu0 0.0
        %745 = vmatpush1.msra.mxu0 0.0
        %746 = vmatprep.subr.mxu0 0.0
        %747 = vmatpush1.msra.mxu0 0.0
        %748 = vmatprep.subr.mxu0 0.0
        %749 = vmatpush1.msra.mxu0 0.0
        %750 = vmatprep.subr.mxu0 0.0
        %751 = vmatpush1.msra.mxu0 0.0
        %752 = vmatprep.subr.mxu0 0.0
        %753 = vmatpush1.msra.mxu0 0.0
        %754 = vmatprep.subr.mxu0 0.0
        %755 = vmatpush1.msra.mxu0 0.0
        %756 = vmatprep.subr.mxu0 0.0
        %757 = vmatpush1.msra.mxu0 0.0
        %758 = vmatprep.subr.mxu0 0.0
        %759 = vmatpush1.msra.mxu0 0.0
        %760 = vmatprep.subr.mxu0 0.0
        %761 = vmatpush1.msra.mxu0 0.0
        %762 = vmatprep.subr.mxu0 0.0
        %763 = vmatpush1.msra.mxu0 0.0
        %764 = vmatprep.subr.mxu0 0.0
        %765 = vmatpush1.msra.mxu0 0.0
        %766 = vmatprep.subr.mxu0 0.0
        %767 = vmatpush1.msra.mxu0 0.0
        %768 = vmatprep.subr.mxu0 0.0
        %769 = vmatpush1.msra.mxu0 0.0
        %770 = vmatprep.subr.mxu0 0.0
        %771 = vmatpush1.msra.mxu0 0.0
        %772 = vmatprep.subr.mxu0 0.0
        %773 = vmatpush1.msra.mxu0 0.0
        %774 = vmatprep.subr.mxu0 0.0
        %775 = vmatpush1.msra.mxu0 0.0
        %776 = vmatprep.subr.mxu0 0.0
        %777 = vmatpush1.msra.mxu0 0.0
        %778 = vmatprep.subr.mxu0 0.0
        %779 = vmatpush1.msra.mxu0 0.0
        %780 = vmatprep.subr.mxu0 0.0
        %781 = vmatpush1.msra.mxu0 0.0
        %782 = vmatprep.subr.mxu0 0.0
        %783 = vmatpush1.msra.mxu0 0.0
        %784 = vmatprep.subr.mxu0 0.0
        %785 = vmatpush1.msra.mxu0 0.0
        %786 = vmatprep.subr.mxu0 0.0
        %787 = vmatpush1.msra.mxu0 0.0
        %788 = vmatprep.subr.mxu0 0.0
        %789 = vmatpush1.msra.mxu0 0.0
        %790 = vmatprep.subr.mxu0 0.0
        %791 = vmatpush1.msra.mxu0 0.0
        %792 = vmatprep.subr.mxu0 0.0
        %793 = vmatpush1.msra.mxu0 0.0
        %794 = vmatprep.subr.mxu0 0.0
        %795 = vmatpush1.msra.mxu0 0.0
        %796 = vmatprep.subr.mxu0 0.0
        %797 = vmatpush1.msra.mxu0 0.0
        %798 = vmatprep.mubr.f32.mxu0 0.0
        %799 = vmatmul.mubr.f32.gmra.mrb[0].mxu0 %v729
        %v800 = vpop.f32.mrb[0].mxu0
        %v801 = vadd.f32 0.0, %v800
        %v802 = vpop.f32.mrb[0].mxu0
        %803 = vmatprep.mubr.f32.mxu0 0.0
        %804 = vmatmul.mubr.f32.gmra.mrb[0].mxu0 %v732
        %v805 = vpop.f32.mrb[0].mxu0
        %v806 = vadd.f32 0.0, %v805
        %v807 = vpop.f32.mrb[0].mxu0
        %808 = vdwg.mxu0
        %809 = vrot.lane.b32.xlu0 %v427, 80
        %v810 = vpop.permute.xlu0 %809
        %v813 = vsel %vm519, %v710, 0
        %v816 = vsel %vm519, %v712, 0
        %818 = vmatprep.subr.mxu0 0.0
        %819 = vmatpush1.msra.mxu0 %v810
        %820 = vmatprep.subr.mxu0 0.0
        %821 = vmatpush1.msra.mxu0 0.0
        %822 = vmatprep.subr.mxu0 0.0
        %823 = vmatpush1.msra.mxu0 0.0
        %824 = vmatprep.subr.mxu0 0.0
        %825 = vmatpush1.msra.mxu0 0.0
        %826 = vmatprep.subr.mxu0 0.0
        %827 = vmatpush1.msra.mxu0 0.0
        %828 = vmatprep.subr.mxu0 0.0
        %829 = vmatpush1.msra.mxu0 0.0
        %830 = vmatprep.subr.mxu0 0.0
        %831 = vmatpush1.msra.mxu0 0.0
        %832 = vmatprep.subr.mxu0 0.0
        %833 = vmatpush1.msra.mxu0 0.0
        %834 = vmatprep.subr.mxu0 0.0
        %835 = vmatpush1.msra.mxu0 0.0
        %836 = vmatprep.subr.mxu0 0.0
        %837 = vmatpush1.msra.mxu0 0.0
        %838 = vmatprep.subr.mxu0 0.0
        %839 = vmatpush1.msra.mxu0 0.0
        %840 = vmatprep.subr.mxu0 0.0
        %841 = vmatpush1.msra.mxu0 0.0
        %842 = vmatprep.subr.mxu0 0.0
        %843 = vmatpush1.msra.mxu0 0.0
        %844 = vmatprep.subr.mxu0 0.0
        %845 = vmatpush1.msra.mxu0 0.0
        %846 = vmatprep.subr.mxu0 0.0
        %847 = vmatpush1.msra.mxu0 0.0
        %848 = vmatprep.subr.mxu0 0.0
        %849 = vmatpush1.msra.mxu0 0.0
        %850 = vmatprep.subr.mxu0 0.0
        %851 = vmatpush1.msra.mxu0 0.0
        %852 = vmatprep.subr.mxu0 0.0
        %853 = vmatpush1.msra.mxu0 0.0
        %854 = vmatprep.subr.mxu0 0.0
        %855 = vmatpush1.msra.mxu0 0.0
        %856 = vmatprep.subr.mxu0 0.0
        %857 = vmatpush1.msra.mxu0 0.0
        %858 = vmatprep.subr.mxu0 0.0
        %859 = vmatpush1.msra.mxu0 0.0
        %860 = vmatprep.subr.mxu0 0.0
        %861 = vmatpush1.msra.mxu0 0.0
        %862 = vmatprep.subr.mxu0 0.0
        %863 = vmatpush1.msra.mxu0 0.0
        %864 = vmatprep.subr.mxu0 0.0
        %865 = vmatpush1.msra.mxu0 0.0
        %866 = vmatprep.subr.mxu0 0.0
        %867 = vmatpush1.msra.mxu0 0.0
        %868 = vmatprep.subr.mxu0 0.0
        %869 = vmatpush1.msra.mxu0 0.0
        %870 = vmatprep.subr.mxu0 0.0
        %871 = vmatpush1.msra.mxu0 0.0
        %872 = vmatprep.subr.mxu0 0.0
        %873 = vmatpush1.msra.mxu0 0.0
        %874 = vmatprep.subr.mxu0 0.0
        %875 = vmatpush1.msra.mxu0 0.0
        %876 = vmatprep.subr.mxu0 0.0
        %877 = vmatpush1.msra.mxu0 0.0
        %878 = vmatprep.subr.mxu0 0.0
        %879 = vmatpush1.msra.mxu0 0.0
        %880 = vmatprep.subr.mxu0 0.0
        %881 = vmatpush1.msra.mxu0 0.0
        %882 = vmatprep.mubr.f32.mxu0 0.0
        %883 = vmatmul.mubr.f32.gmra.mrb[0].mxu0 %v813
        %v884 = vpop.f32.mrb[0].mxu0
        %v885 = vadd.f32 0.0, %v884
        %v886 = vpop.f32.mrb[0].mxu0
        %887 = vmatprep.mubr.f32.mxu0 0.0
        %888 = vmatmul.mubr.f32.gmra.mrb[0].mxu0 %v816
        %v889 = vpop.f32.mrb[0].mxu0
        %v890 = vadd.f32 0.0, %v889
        %v891 = vpop.f32.mrb[0].mxu0
        %892 = vdwg.mxu0
        %v893 = vrcp.pop %v715
        %v894 = vrcp.pop %v718
        %v895 = vrcp.pop %v721
        %v896 = vrcp.pop %v724
        %v897 = vmul.f32 %v801, %v893
        %v898 = vmul.f32 %v806, %v894
        %v899 = vmul.f32 %v885, %v895
        %v900 = vmul.f32 %v890, %v896
        %902 = vrot.lane.b32.xlu0 %v898, 8
        %v903 = vpop.permute.xlu0 %902
        %906 = vrot.lane.b32.xlu0 %v899, 16
        %v907 = vpop.permute.xlu0 %906
        %910 = vrot.lane.b32.xlu0 %v900, 24
        %v911 = vpop.permute.xlu0 %910
        %v913 = vsel %vm519, %v897, %v903
        %vm914 = vcmask 130048
        %v915 = vsel %vm914, %v913, %v907
        %vm916 = vcmask 195584
        %v917 = vsel %vm916, %v915, %v911
        %v918 = vld [vmem:[%s2] sm:$0xff]
        %v919 = vld [vmem:[%s2 + $0x8] sm:$0xff]
        %v920 = vld [vmem:[%s2 + $0x10] sm:$0xff]
        %v921 = vld [vmem:[%s2 + $0x18] sm:$0xff]
        %v923 = vsel %vm351, %v917, 0
        %925 = vmatprep.subr.mxu0 0.0
        %926 = vmatpush1.msra.mxu0 %v918
        %927 = vmatprep.subr.mxu0 0.0
        %928 = vmatpush1.msra.mxu0 %v919
        %929 = vmatprep.subr.mxu0 0.0
        %930 = vmatpush1.msra.mxu0 %v920
        %931 = vmatprep.subr.mxu0 0.0
        %932 = vmatpush1.msra.mxu0 %v921
        %933 = vmatprep.subr.mxu0 0.0
        %934 = vmatpush1.msra.mxu0 0.0
        %935 = vmatprep.subr.mxu0 0.0
        %936 = vmatpush1.msra.mxu0 0.0
        %937 = vmatprep.subr.mxu0 0.0
        %938 = vmatpush1.msra.mxu0 0.0
        %939 = vmatprep.subr.mxu0 0.0
        %940 = vmatpush1.msra.mxu0 0.0
        %941 = vmatprep.subr.mxu0 0.0
        %942 = vmatpush1.msra.mxu0 0.0
        %943 = vmatprep.subr.mxu0 0.0
        %944 = vmatpush1.msra.mxu0 0.0
        %945 = vmatprep.subr.mxu0 0.0
        %946 = vmatpush1.msra.mxu0 0.0
        %947 = vmatprep.subr.mxu0 0.0
        %948 = vmatpush1.msra.mxu0 0.0
        %949 = vmatprep.subr.mxu0 0.0
        %950 = vmatpush1.msra.mxu0 0.0
        %951 = vmatprep.subr.mxu0 0.0
        %952 = vmatpush1.msra.mxu0 0.0
        %953 = vmatprep.subr.mxu0 0.0
        %954 = vmatpush1.msra.mxu0 0.0
        %955 = vmatprep.subr.mxu0 0.0
        %956 = vmatpush1.msra.mxu0 0.0
        %957 = vmatprep.subr.mxu0 0.0
        %958 = vmatpush1.msra.mxu0 0.0
        %959 = vmatprep.subr.mxu0 0.0
        %960 = vmatpush1.msra.mxu0 0.0
        %961 = vmatprep.subr.mxu0 0.0
        %962 = vmatpush1.msra.mxu0 0.0
        %963 = vmatprep.subr.mxu0 0.0
        %964 = vmatpush1.msra.mxu0 0.0
        %965 = vmatprep.subr.mxu0 0.0
        %966 = vmatpush1.msra.mxu0 0.0
        %967 = vmatprep.subr.mxu0 0.0
        %968 = vmatpush1.msra.mxu0 0.0
        %969 = vmatprep.subr.mxu0 0.0
        %970 = vmatpush1.msra.mxu0 0.0
        %971 = vmatprep.subr.mxu0 0.0
        %972 = vmatpush1.msra.mxu0 0.0
        %973 = vmatprep.subr.mxu0 0.0
        %974 = vmatpush1.msra.mxu0 0.0
        %975 = vmatprep.subr.mxu0 0.0
        %976 = vmatpush1.msra.mxu0 0.0
        %977 = vmatprep.subr.mxu0 0.0
        %978 = vmatpush1.msra.mxu0 0.0
        %979 = vmatprep.subr.mxu0 0.0
        %980 = vmatpush1.msra.mxu0 0.0
        %981 = vmatprep.subr.mxu0 0.0
        %982 = vmatpush1.msra.mxu0 0.0
        %983 = vmatprep.subr.mxu0 0.0
        %984 = vmatpush1.msra.mxu0 0.0
        %985 = vmatprep.subr.mxu0 0.0
        %986 = vmatpush1.msra.mxu0 0.0
        %987 = vmatprep.subr.mxu0 0.0
        %988 = vmatpush1.msra.mxu0 0.0
        %989 = vmatprep.mubr.f32.mxu0 0.0
        %990 = vmatmul.mubr.f32.gmra.mrb[0].mxu0 %v923
        %v991 = vpop.f32.mrb[0].mxu0
        %v992 = vadd.f32 0.0, %v991
        %v993 = vpop.f32.mrb[0].mxu0
        %994 = vdwg.mxu0
        %995 = vst.msk [vmem:[%s345] sm:$0xff] %vm351, %v992
        %s996 = sand.u32 %s207, 1
        %s997 = scalar_lea.sflag [#allocation4], %s996
        %s998 = sand.u32 %s207, 1
        %s999 = smul.addr %s998, 8
        %s1000 = scalar_lea.vmem [#allocation8], %s999
        // Predicated region
        $region65: #{mistral_attention.1} parent=51 // pred_check
          %p1001 = pneg %p217
        $region66: #{mistral_attention.1} parent=51 // pred_check_branch
          %1003 = sbr.rel (%p1001) target = $region68
        $region67: #{mistral_attention.1} parent=51 // pred_region
          %s1005 = ssub.s32 128, 128
          %1006 = vsyncadd %s997, %s1005
          %s1007 = smul.addr %s26, 128
          %s1008 = scalar_lea.hbm %s8, %s1007
          %s1010 = sshll.u32 %s1000, 4
          %s1011 = int_to_ptr.vmem [resolvable:$true] %s1010
          %1013 = dma.vmem_to_hbm [thread:$0]  %s1011, 128, %s1008, %s997
        $region68: #{mistral_attention.1} parent=51 // pred_fallthru
          _
      $region52: #{mistral_attention.1} parent=5 // pred_fallthru
        _
      %p1014 = scmp.le.s32.totalorder 2, %s21
      // Predicated region
      $region69: #{mistral_attention.1} parent=5 // pred_check
        %p1015 = pneg %p1014
      $region70: #{mistral_attention.1} parent=5 // pred_check_branch
        %1017 = sbr.rel (%p1015) target = $region72
      $region71: #{mistral_attention.1} parent=5 // pred_region
        %s1018 = ssub.s32 %s21, 2
        // Predicated region
        $region73: #{mistral_attention.1} parent=71 // pred_check
          %p1019 = pneg %p223
        $region74: #{mistral_attention.1} parent=71 // pred_check_branch
          %1021 = sbr.rel (%p1019) target = $region76
        $region75: #{mistral_attention.1} parent=71 // pred_region
          %s1022 = sand.u32 %s208, 1
          %s1023 = scalar_lea.sflag [#allocation4], %s1022
          %s1024 = sand.u32 %s208, 1
          %s1025 = smul.addr %s1024, 8
          %s1026 = scalar_lea.vmem [#allocation8], %s1025
          %1027 = dma.done %s1023, 128
        $region76: #{mistral_attention.1} parent=71 // pred_fallthru
          _
      $region72: #{mistral_attention.1} parent=5 // pred_fallthru
        _
    $region6: #{mistral_attention.1} parent=1 // loop_footer
      %s25 = sadd.s32 1, %s21
    $region7: #{mistral_attention.1} parent=1 // loop_footer_branch
      %20 = sbr.rel target = $region3
    $region8: #{mistral_attention.1} parent=1 // loop_exit
      _
    %1028 = vsyncpa [#allocation3], 1
    %s1029 = scalar_lea.sflag [#allocation3], 1
    %1030 = vsyncpa %s1029, 1
    %1031 = vsyncpa [#allocation6], 1
    %1032 = vsyncpa [#allocation4], 1
    %s1033 = scalar_lea.sflag [#allocation4], 1
    %1034 = vsyncpa %s1033, 1

</llo_original>
